<compile_context>
chip_gen: v6e
topology: v6e:2x2x1
jax: 0.10.0
libtpu: 0.0.40
codegen_flags: <defaults>
</compile_context>

<pallas_src>
import jax
import jax.numpy as jnp
from jax.experimental import pallas as pl
from jax.experimental.pallas import tpu as pltpu

HIDDEN = 40


def slp_kernel(xT_ref, w1_ref, b1_ref, w2_ref, b2_ref, oT_ref):
    # hidden^T = relu(W1 @ x^T + b1): (H, TB), f32 accumulation on MXU
    h = jnp.dot(w1_ref[...], xT_ref[...], preferred_element_type=jnp.float32)
    h = jnp.maximum(h + b1_ref[...], 0.0)          # bias (H,1) broadcasts over lanes; f32 VPU
    # y^T = W2 @ hidden^T + b2: (D_out, TB) -> lane-dense store (TB >= 128)
    y = jnp.dot(w2_ref[...], h.astype(w2_ref.dtype), preferred_element_type=jnp.float32)
    oT_ref[...] = y + b2_ref[...]


def slp_forward(x, w1, b1, w2, b2, *, block_batch=None, bf16_matmul=False):
    """x: (B, D_in); w1: (H, D_in); b1: (H,); w2: (D_out, H); b2: (D_out,).
    Weight/bias layout matches torch.nn.Linear. Returns (B, D_out) float32."""
    B, D_in = x.shape
    H = w1.shape[0]
    D_out = w2.shape[0]

    if block_batch is None:
        # Lane-dense tile: at least 128 lanes, capped at 512 (VMEM-safe on v7x).
        block_batch = min(pl.cdiv(B, 128) * 128, 512)
    Bp = pl.cdiv(B, block_batch) * block_batch

    mm_dtype = jnp.bfloat16 if bf16_matmul else jnp.float32

    # Transpose + zero-pad batch up to the tile multiple (padding rows compute garbage
    # that is sliced away below; weights are unaffected).
    xT = jnp.zeros((D_in, Bp), mm_dtype).at[:, :B].set(x.T.astype(mm_dtype))
    w1c = w1.astype(mm_dtype)
    w2c = w2.astype(mm_dtype)
    b1c = b1.reshape(H, 1).astype(jnp.float32)
    b2c = b2.reshape(D_out, 1).astype(jnp.float32)

    itemsize = jnp.dtype(mm_dtype).itemsize
    flops = 2 * B * (D_in * H + H * D_out)
    bytes_accessed = (itemsize * (D_in * Bp + H * D_in + D_out * H)
                      + 4 * (H + D_out + D_out * Bp))

    yT = pl.pallas_call(
        slp_kernel,
        out_shape=jax.ShapeDtypeStruct((D_out, Bp), jnp.float32),
        grid_spec=pltpu.PrefetchScalarGridSpec(
            num_scalar_prefetch=0,
            grid=(Bp // block_batch,),
            in_specs=[
                pl.BlockSpec((D_in, block_batch), lambda i: (0, i)),   # x^T tile (pipelined)
                pl.BlockSpec((H, D_in), lambda i: (0, 0)),             # W1  (resident)
                pl.BlockSpec((H, 1), lambda i: (0, 0)),                # b1  (resident)
                pl.BlockSpec((D_out, H), lambda i: (0, 0)),            # W2  (resident)
                pl.BlockSpec((D_out, 1), lambda i: (0, 0)),            # b2  (resident)
            ],
            out_specs=pl.BlockSpec((D_out, block_batch), lambda i: (0, i)),
        ),
        compiler_params=pltpu.CompilerParams(
            dimension_semantics=("parallel",),   # v7x: shard batch tiles across both TCs
        ),
        cost_estimate=pl.CostEstimate(
            flops=flops, transcendentals=0, bytes_accessed=bytes_accessed),
    )(xT, w1c, b1c, w2c, b2c)

    return yT[:, :B].T


def init_linear_params(key, fan_in, fan_out):
    """torch.nn.Linear default init: U(-1/sqrt(fan_in), 1/sqrt(fan_in)); weight=(out,in)."""
    kw, kb = jax.random.split(key)
    bound = 1.0 / (fan_in ** 0.5)
    w = jax.random.uniform(kw, (fan_out, fan_in), jnp.float32, -bound, bound)
    b = jax.random.uniform(kb, (fan_out,), jnp.float32, -bound, bound)
    return w, b


def _ref_forward(x, w1, b1, w2, b2):
    h = jnp.maximum(x @ w1.T + b1, 0.0)
    return h @ w2.T + b2


if __name__ == "__main__":
    # Module config: input_shape=(16,), output_shape=8, hidden fixed at 40.
    IN_FEATURES, OUT_FEATURES = 16, 8
    BATCH = 2

    key = jax.random.PRNGKey(0)
    k_x, k_x2, k_l1, k_l2 = jax.random.split(key, 4)

    w1, b1 = init_linear_params(k_l1, IN_FEATURES, HIDDEN)
    w2, b2 = init_linear_params(k_l2, HIDDEN, OUT_FEATURES)

    # Tiny batch (matches the toy module usage): padded to one 128-lane tile internally.
    x_small = jax.random.normal(k_x, (BATCH, IN_FEATURES), jnp.float32)
    y_small = slp_forward(x_small, w1, b1, w2, b2)
    jax.block_until_ready(y_small)
    assert y_small.shape == (BATCH, OUT_FEATURES)
    assert jnp.allclose(y_small, _ref_forward(x_small, w1, b1, w2, b2), atol=1e-5, rtol=1e-5)

    # Larger, non-multiple batch exercising the multi-tile grid + padding path.
    x_big = jax.random.normal(k_x2, (300, IN_FEATURES), jnp.float32)
    y_big = slp_forward(x_big, w1, b1, w2, b2, block_batch=128)
    jax.block_until_ready(y_big)
    assert y_big.shape == (300, OUT_FEATURES)
    assert jnp.allclose(y_big, _ref_forward(x_big, w1, b1, w2, b2), atol=1e-5, rtol=1e-5)

    # bf16 MXU-input path (v6e bandwidth optimization); accumulation/bias/relu stay f32.
    y_bf16 = slp_forward(x_big, w1, b1, w2, b2, bf16_matmul=True)
    jax.block_until_ready(y_bf16)
    assert jnp.allclose(y_bf16, _ref_forward(x_big, w1, b1, w2, b2), atol=3e-2, rtol=3e-2)

    print("KERNEL_OK")
</pallas_src>

<mosaic_0001>
module attributes {stable_mosaic.version = 11 : i64} {
  func.func @slp_kernel(%arg0: i32, %arg1: memref<16x128xf32, #tpu.memory_space<vmem>>, %arg2: memref<40x16xf32, #tpu.memory_space<vmem>>, %arg3: memref<40x1xf32, #tpu.memory_space<vmem>>, %arg4: memref<8x40xf32, #tpu.memory_space<vmem>>, %arg5: memref<8x1xf32, #tpu.memory_space<vmem>>, %arg6: memref<8x128xf32, #tpu.memory_space<vmem>>) attributes {dimension_semantics = [#tpu.dimension_semantics<parallel>], iteration_bounds = array<i64: 1>, scalar_prefetch = 0 : i64, scratch_operands = 0 : i64, tpu.core_type = #tpu.core_type<tc>, window_params = [{transform_indices = @transform_0, window_bounds = array<i64: 16, 128>}, {pipeline_mode = #tpu.pipeline_mode<synchronous>, transform_indices = @transform_1, window_bounds = array<i64: 40, 16>}, {pipeline_mode = #tpu.pipeline_mode<synchronous>, transform_indices = @transform_2, window_bounds = array<i64: 40, 1>}, {pipeline_mode = #tpu.pipeline_mode<synchronous>, transform_indices = @transform_3, window_bounds = array<i64: 8, 40>}, {pipeline_mode = #tpu.pipeline_mode<synchronous>, transform_indices = @transform_4, window_bounds = array<i64: 8, 1>}, {transform_indices = @transform_5, window_bounds = array<i64: 8, 128>}]} {
    %c0 = arith.constant 0 : index
    %c0_0 = arith.constant 0 : index
    %0 = vector.load %arg2[%c0, %c0_0] : memref<40x16xf32, #tpu.memory_space<vmem>>, vector<40x16xf32>
    %c0_1 = arith.constant 0 : index
    %c0_2 = arith.constant 0 : index
    %1 = vector.load %arg1[%c0_1, %c0_2] : memref<16x128xf32, #tpu.memory_space<vmem>>, vector<16x128xf32>
    %cst = arith.constant dense<0.000000e+00> : vector<40x128xf32>
    %2 = tpu.matmul %0, %1, %cst {dimension_numbers = #tpu.dot_dimension_numbers<[1], [0], [0], [1], [0, 0, 1, 1], [], []>} : vector<40x16xf32>, vector<16x128xf32>, vector<40x128xf32> -> vector<40x128xf32>
    %c0_3 = arith.constant 0 : index
    %c0_4 = arith.constant 0 : index
    %3 = vector.load %arg3[%c0_3, %c0_4] : memref<40x1xf32, #tpu.memory_space<vmem>>, vector<40x1xf32>
    %4 = vector.broadcast %3 : vector<40x1xf32> to vector<40x128xf32>
    %5 = arith.addf %2, %4 : vector<40x128xf32>
    %cst_5 = arith.constant 0.000000e+00 : f32
    %6 = vector.broadcast %cst_5 : f32 to vector<40x128xf32>
    %7 = arith.maximumf %5, %6 : vector<40x128xf32>
    %c0_6 = arith.constant 0 : index
    %c0_7 = arith.constant 0 : index
    %8 = vector.load %arg4[%c0_6, %c0_7] : memref<8x40xf32, #tpu.memory_space<vmem>>, vector<8x40xf32>
    %cst_8 = arith.constant dense<0.000000e+00> : vector<8x128xf32>
    %9 = tpu.matmul %8, %7, %cst_8 {dimension_numbers = #tpu.dot_dimension_numbers<[1], [0], [0], [1], [0, 0, 1, 1], [], []>} : vector<8x40xf32>, vector<40x128xf32>, vector<8x128xf32> -> vector<8x128xf32>
    %c0_9 = arith.constant 0 : index
    %c0_10 = arith.constant 0 : index
    %10 = vector.load %arg5[%c0_9, %c0_10] : memref<8x1xf32, #tpu.memory_space<vmem>>, vector<8x1xf32>
    %11 = vector.broadcast %10 : vector<8x1xf32> to vector<8x128xf32>
    %12 = arith.addf %9, %11 : vector<8x128xf32>
    %c0_11 = arith.constant 0 : index
    %c0_12 = arith.constant 0 : index
    %13 = vector.load %arg6[%c0_11, %c0_12] : memref<8x128xf32, #tpu.memory_space<vmem>>, vector<8x128xf32>
    tpu.vector_store %arg6[%c0_11, %c0_12], %12 {strides = array<i32>} : memref<8x128xf32, #tpu.memory_space<vmem>>, vector<8x128xf32>,
    return
  }
  func.func @transform_0(%arg0: i32) -> (i32, i32) {
    %c0_i32 = arith.constant 0 : i32
    %c0_i32_0 = arith.constant 0 : i32
    return %c0_i32, %arg0 : i32, i32
  }
  func.func @transform_1(%arg0: i32) -> (i32, i32) {
    %c0_i32 = arith.constant 0 : i32
    %c0_i32_0 = arith.constant 0 : i32
    %c0_i32_1 = arith.constant 0 : i32
    return %c0_i32, %c0_i32_0 : i32, i32
  }
  func.func @transform_2(%arg0: i32) -> (i32, i32) {
    %c0_i32 = arith.constant 0 : i32
    %c0_i32_0 = arith.constant 0 : i32
    %c0_i32_1 = arith.constant 0 : i32
    return %c0_i32, %c0_i32_0 : i32, i32
  }
  func.func @transform_3(%arg0: i32) -> (i32, i32) {
    %c0_i32 = arith.constant 0 : i32
    %c0_i32_0 = arith.constant 0 : i32
    %c0_i32_1 = arith.constant 0 : i32
    return %c0_i32, %c0_i32_0 : i32, i32
  }
  func.func @transform_4(%arg0: i32) -> (i32, i32) {
    %c0_i32 = arith.constant 0 : i32
    %c0_i32_0 = arith.constant 0 : i32
    %c0_i32_1 = arith.constant 0 : i32
    return %c0_i32, %c0_i32_0 : i32, i32
  }
  func.func @transform_5(%arg0: i32) -> (i32, i32) {
    %c0_i32 = arith.constant 0 : i32
    %c0_i32_0 = arith.constant 0 : i32
    return %c0_i32, %arg0 : i32, i32
  }
}

</mosaic_0001>

<llo_original>
// kernel: tpu_custom_call.1
$region0: #{tpu_custom_call.1}
  #allocation0 [shape = 'u32[]', space=smem, size = 0x4, offset = 0x4, fixed_abs, tag = 'smem constant byte address 0x4 - core index']
  #allocation1 [shape = 'u32[144,128]{1,0:T(1,128)}', space=vmem, size = 0x12000, scoped, tag = 'internal scratch']
  %s0 = inlined_call_operand.vmem [shape: f32[16,128], index: 0, kind: input, shape index: {}]
  %s1 = inlined_call_operand.vmem [shape: f32[40,16], index: 1, kind: input, shape index: {}]
  %s2 = inlined_call_operand.vmem [shape: f32[40,1], index: 2, kind: input, shape index: {}]
  %s3 = inlined_call_operand.vmem [shape: f32[8,40], index: 3, kind: input, shape index: {}]
  %s4 = inlined_call_operand.vmem [shape: f32[8,1], index: 4, kind: input, shape index: {}]
  %s5 = inlined_call_operand.hbm [shape: f32[8,128], index: 5, kind: output, shape index: {}]
  %s6 = sld [smem:[#allocation0]]
  $region30: #{tpu_custom_call.1} parent=0
    _
  %s8 = ssub.s32 1, %s6
  %s9 = scalar_select 0, %s8, %s6
  $region1: #{tpu_custom_call.1} parent=0
    #allocation2 [shape = 'u8[4096]{0}', space=vmem, size = 0x1000, scoped, tag = 'output window, operand 0, single buffered']
    #allocation3 [shape = 's32[1]{0}', space=sflag, size = 0x4, scoped, tag = 'scoped memory for tpu_custom_call.1']
    %10 = vsyncpa [#allocation3], 0
    // Predicated region
    $region2: #{tpu_custom_call.1} parent=1 // pred_check
      _
    $region3: #{tpu_custom_call.1} parent=1 // pred_check_branch
      %12 = sbr.rel (0) target = $region5
    $region4: #{tpu_custom_call.1} parent=1 // pred_region
      _
    $region5: #{tpu_custom_call.1} parent=1 // pred_fallthru
      _
    // Predicated region
    $region6: #{tpu_custom_call.1} parent=1 // pred_check
      _
    $region7: #{tpu_custom_call.1} parent=1 // pred_check_branch
      %14 = sbr.rel (0) target = $region9
    $region8: #{tpu_custom_call.1} parent=1 // pred_region
      _
    $region9: #{tpu_custom_call.1} parent=1 // pred_fallthru
      _
    // Predicated region
    $region10: #{tpu_custom_call.1} parent=1 // pred_check
      _
    $region11: #{tpu_custom_call.1} parent=1 // pred_check_branch
      %16 = sbr.rel (0) target = $region13
    $region12: #{tpu_custom_call.1} parent=1 // pred_region
      _
    $region13: #{tpu_custom_call.1} parent=1 // pred_fallthru
      _
    // Predicated region
    $region14: #{tpu_custom_call.1} parent=1 // pred_check
      _
    $region15: #{tpu_custom_call.1} parent=1 // pred_check_branch
      %18 = sbr.rel (0) target = $region17
    $region16: #{tpu_custom_call.1} parent=1 // pred_region
      _
    $region17: #{tpu_custom_call.1} parent=1 // pred_fallthru
      _
    // Predicated region
    $region18: #{tpu_custom_call.1} parent=1 // pred_check
      _
    $region19: #{tpu_custom_call.1} parent=1 // pred_check_branch
      %20 = sbr.rel (0) target = $region21
    $region20: #{tpu_custom_call.1} parent=1 // pred_region
      _
    $region21: #{tpu_custom_call.1} parent=1 // pred_fallthru
      _
    %v21 = vld [vmem:[%s1] sm:$0xff]
    %v22 = vld [vmem:[%s1 + $0x8] sm:$0xff]
    %v23 = vld [vmem:[%s1 + $0x10] sm:$0xff]
    %v24 = vld [vmem:[%s1 + $0x18] sm:$0xff]
    %v25 = vld [vmem:[%s1 + $0x20] sm:$0xff]
    %v26 = vld [vmem:[%s0] sm:$0xff]
    %v27 = vld [vmem:[%s0 + $0x8] sm:$0xff]
    %v28 = vld [vmem:[%s2] sm:$0xff]
    %v29 = vld [vmem:[%s2 + $0x8] sm:$0xff]
    %v30 = vld [vmem:[%s2 + $0x10] sm:$0xff]
    %v31 = vld [vmem:[%s2 + $0x18] sm:$0xff]
    %v32 = vld [vmem:[%s2 + $0x20] sm:$0xff]
    %34 = vset.pattern.permute.xlu0 0
    %35 = vperm.xlu0 %34, %v28
    %v36 = vpop.permute.xlu0 %35
    %39 = vset.pattern.permute.xlu0 0
    %40 = vperm.xlu0 %39, %v29
    %v41 = vpop.permute.xlu0 %40
    %44 = vset.pattern.permute.xlu0 0
    %45 = vperm.xlu0 %44, %v30
    %v46 = vpop.permute.xlu0 %45
    %49 = vset.pattern.permute.xlu0 0
    %50 = vperm.xlu0 %49, %v31
    %v51 = vpop.permute.xlu0 %50
    %54 = vset.pattern.permute.xlu0 0
    %55 = vperm.xlu0 %54, %v32
    %v56 = vpop.permute.xlu0 %55
    %vm58 = vcmask 130048
    %v60 = vsel %vm58, %v21, 0
    %v63 = vsel %vm58, %v22, 0
    %v66 = vsel %vm58, %v23, 0
    %v69 = vsel %vm58, %v24, 0
    %v72 = vsel %vm58, %v25, 0
    %74 = vmatprep.subr.mxu0 0.0
    %75 = vmatpush1.msra.mxu0 0.0
    %76 = vmatprep.subr.mxu0 0.0
    %77 = vmatpush1.msra.mxu0 0.0
    %78 = vmatprep.subr.mxu0 0.0
    %79 = vmatpush1.msra.mxu0 0.0
    %80 = vmatprep.subr.mxu0 0.0
    %81 = vmatpush1.msra.mxu0 0.0
    %82 = vmatprep.subr.mxu0 0.0
    %83 = vmatpush1.msra.mxu0 0.0
    %84 = vmatprep.subr.mxu0 0.0
    %85 = vmatpush1.msra.mxu0 0.0
    %86 = vmatprep.subr.mxu0 0.0
    %87 = vmatpush1.msra.mxu0 0.0
    %88 = vmatprep.subr.mxu0 0.0
    %89 = vmatpush1.msra.mxu0 0.0
    %90 = vmatprep.subr.mxu0 0.0
    %91 = vmatpush1.msra.mxu0 0.0
    %92 = vmatprep.subr.mxu0 0.0
    %93 = vmatpush1.msra.mxu0 0.0
    %94 = vmatprep.subr.mxu0 0.0
    %95 = vmatpush1.msra.mxu0 0.0
    %96 = vmatprep.subr.mxu0 0.0
    %97 = vmatpush1.msra.mxu0 0.0
    %98 = vmatprep.subr.mxu0 0.0
    %99 = vmatpush1.msra.mxu0 0.0
    %100 = vmatprep.subr.mxu0 0.0
    %101 = vmatpush1.msra.mxu0 0.0
    %102 = vmatprep.subr.mxu0 0.0
    %103 = vmatpush1.msra.mxu0 %v27
    %104 = vmatprep.subr.mxu0 0.0
    %105 = vmatpush1.msra.mxu0 %v26
    %106 = vmatprep.subr.mxu0 0.0
    %107 = vmatpush2.msra.mxu0 0.0
    %108 = vmatprep.subr.mxu0 0.0
    %109 = vmatpush2.msra.mxu0 0.0
    %110 = vmatprep.subr.mxu0 0.0
    %111 = vmatpush2.msra.mxu0 0.0
    %112 = vmatprep.subr.mxu0 0.0
    %113 = vmatpush2.msra.mxu0 0.0
    %114 = vmatprep.subr.mxu0 0.0
    %115 = vmatpush2.msra.mxu0 0.0
    %116 = vmatprep.subr.mxu0 0.0
    %117 = vmatpush2.msra.mxu0 0.0
    %118 = vmatprep.subr.mxu0 0.0
    %119 = vmatpush2.msra.mxu0 0.0
    %120 = vmatprep.subr.mxu0 0.0
    %121 = vmatpush2.msra.mxu0 0.0
    %122 = vmatprep.subr.mxu0 0.0
    %123 = vmatpush2.msra.mxu0 0.0
    %124 = vmatprep.subr.mxu0 0.0
    %125 = vmatpush2.msra.mxu0 0.0
    %126 = vmatprep.subr.mxu0 0.0
    %127 = vmatpush2.msra.mxu0 0.0
    %128 = vmatprep.subr.mxu0 0.0
    %129 = vmatpush2.msra.mxu0 0.0
    %130 = vmatprep.subr.mxu0 0.0
    %131 = vmatpush2.msra.mxu0 0.0
    %132 = vmatprep.subr.mxu0 0.0
    %133 = vmatpush2.msra.mxu0 0.0
    %134 = vmatprep.subr.mxu0 0.0
    %135 = vmatpush2.msra.mxu0 0.0
    %136 = vmatprep.subr.mxu0 0.0
    %137 = vmatpush2.msra.mxu0 0.0
    %138 = vmatprep.mubr.f32.mxu0 0.0
    %139 = vmatmul.mubr.f32.gmra.mxu0 %v60
    %v140 = vpop.f32.mrf.mxu0
    %v141 = vadd.f32 %v36, %v140
    %v142 = vpop.f32.mrf.mxu0
    %143 = vmatprep.mubr.f32.mxu0 0.0
    %144 = vmatmul.mubr.f32.gmra.mxu0 %v63
    %v145 = vpop.f32.mrf.mxu0
    %v146 = vadd.f32 %v41, %v145
    %v147 = vpop.f32.mrf.mxu0
    %148 = vmatprep.mubr.f32.mxu0 0.0
    %149 = vmatmul.mubr.f32.gmra.mxu0 %v66
    %v150 = vpop.f32.mrf.mxu0
    %v151 = vadd.f32 %v46, %v150
    %v152 = vpop.f32.mrf.mxu0
    %153 = vmatprep.mubr.f32.mxu0 0.0
    %154 = vmatmul.mubr.f32.gmra.mxu0 %v69
    %v155 = vpop.f32.mrf.mxu0
    %v156 = vadd.f32 %v51, %v155
    %v157 = vpop.f32.mrf.mxu0
    %158 = vmatprep.mubr.f32.mxu0 0.0
    %159 = vmatmul.mubr.f32.gmra.mxu0 %v72
    %v160 = vpop.f32.mrf.mxu0
    %v161 = vadd.f32 %v56, %v160
    %v162 = vpop.f32.mrf.mxu0
    %163 = vdwg.mxu0
    %v164 = vmax.f32 %v141, 0.0
    %v165 = vmax.f32 %v146, 0.0
    %v166 = vmax.f32 %v151, 0.0
    %v167 = vmax.f32 %v156, 0.0
    %v168 = vmax.f32 %v161, 0.0
    %v169 = vld [vmem:[%s3] sm:$0xff]
    %v170 = vld [vmem:[%s4] sm:$0xff]
    %172 = vset.pattern.permute.xlu0 0
    %173 = vperm.xlu0 %172, %v170
    %v174 = vpop.permute.xlu0 %173
    %vm176 = vcmask 326656
    %v178 = vsel %vm176, %v169, 0
    %180 = vmatprep.subr.mxu0 0.0
    %181 = vmatpush1.msra.mxu0 0.0
    %182 = vmatprep.subr.mxu0 0.0
    %183 = vmatpush1.msra.mxu0 0.0
    %184 = vmatprep.subr.mxu0 0.0
    %185 = vmatpush1.msra.mxu0 0.0
    %186 = vmatprep.subr.mxu0 0.0
    %187 = vmatpush1.msra.mxu0 0.0
    %188 = vmatprep.subr.mxu0 0.0
    %189 = vmatpush1.msra.mxu0 0.0
    %190 = vmatprep.subr.mxu0 0.0
    %191 = vmatpush1.msra.mxu0 0.0
    %192 = vmatprep.subr.mxu0 0.0
    %193 = vmatpush1.msra.mxu0 0.0
    %194 = vmatprep.subr.mxu0 0.0
    %195 = vmatpush1.msra.mxu0 0.0
    %196 = vmatprep.subr.mxu0 0.0
    %197 = vmatpush1.msra.mxu0 0.0
    %198 = vmatprep.subr.mxu0 0.0
    %199 = vmatpush1.msra.mxu0 0.0
    %200 = vmatprep.subr.mxu0 0.0
    %201 = vmatpush1.msra.mxu0 0.0
    %202 = vmatprep.subr.mxu0 0.0
    %203 = vmatpush1.msra.mxu0 %v168
    %204 = vmatprep.subr.mxu0 0.0
    %205 = vmatpush1.msra.mxu0 %v167
    %206 = vmatprep.subr.mxu0 0.0
    %207 = vmatpush1.msra.mxu0 %v166
    %208 = vmatprep.subr.mxu0 0.0
    %209 = vmatpush1.msra.mxu0 %v165
    %210 = vmatprep.subr.mxu0 0.0
    %211 = vmatpush1.msra.mxu0 %v164
    %212 = vmatprep.subr.mxu0 0.0
    %213 = vmatpush2.msra.mxu0 0.0
    %214 = vmatprep.subr.mxu0 0.0
    %215 = vmatpush2.msra.mxu0 0.0
    %216 = vmatprep.subr.mxu0 0.0
    %217 = vmatpush2.msra.mxu0 0.0
    %218 = vmatprep.subr.mxu0 0.0
    %219 = vmatpush2.msra.mxu0 0.0
    %220 = vmatprep.subr.mxu0 0.0
    %221 = vmatpush2.msra.mxu0 0.0
    %222 = vmatprep.subr.mxu0 0.0
    %223 = vmatpush2.msra.mxu0 0.0
    %224 = vmatprep.subr.mxu0 0.0
    %225 = vmatpush2.msra.mxu0 0.0
    %226 = vmatprep.subr.mxu0 0.0
    %227 = vmatpush2.msra.mxu0 0.0
    %228 = vmatprep.subr.mxu0 0.0
    %229 = vmatpush2.msra.mxu0 0.0
    %230 = vmatprep.subr.mxu0 0.0
    %231 = vmatpush2.msra.mxu0 0.0
    %232 = vmatprep.subr.mxu0 0.0
    %233 = vmatpush2.msra.mxu0 0.0
    %234 = vmatprep.subr.mxu0 0.0
    %235 = vmatpush2.msra.mxu0 0.0
    %236 = vmatprep.subr.mxu0 0.0
    %237 = vmatpush2.msra.mxu0 0.0
    %238 = vmatprep.subr.mxu0 0.0
    %239 = vmatpush2.msra.mxu0 0.0
    %240 = vmatprep.subr.mxu0 0.0
    %241 = vmatpush2.msra.mxu0 0.0
    %242 = vmatprep.subr.mxu0 0.0
    %243 = vmatpush2.msra.mxu0 0.0
    %244 = vmatprep.mubr.f32.mxu0 0.0
    %245 = vmatmul.mubr.f32.gmra.mxu0 %v178
    %v246 = vpop.f32.mrf.mxu0
    %v247 = vadd.f32 %v174, %v246
    %v248 = vpop.f32.mrf.mxu0
    %249 = vdwg.mxu0
    %250 = vst [vmem:[#allocation2] sm:$0xff] %v247
    // Predicated region
    $region22: #{tpu_custom_call.1} parent=1 // pred_check
      _
    $region23: #{tpu_custom_call.1} parent=1 // pred_check_branch
      %252 = sbr.rel (0) target = $region25
    $region24: #{tpu_custom_call.1} parent=1 // pred_region
      %s254 = ssub.s32 128, 128
      %255 = vsyncadd [#allocation3], %s254
      %s257 = sshll.u32 [#allocation2], 4
      %s258 = int_to_ptr.vmem [resolvable:$true] %s257
      %260 = dma.vmem_to_hbm [thread:$0]  %s258, 128, %s5, [#allocation3]
    $region25: #{tpu_custom_call.1} parent=1 // pred_fallthru
      _
    // Predicated region
    $region26: #{tpu_custom_call.1} parent=1 // pred_check
      _
    $region27: #{tpu_custom_call.1} parent=1 // pred_check_branch
      %262 = sbr.rel (0) target = $region29
    $region28: #{tpu_custom_call.1} parent=1 // pred_region
      %263 = dma.done [#allocation3], 128
    $region29: #{tpu_custom_call.1} parent=1 // pred_fallthru
      _
    %264 = vsyncpa [#allocation3], 1

</llo_original>
